<compile_context>
chip_gen: v5e
topology: v5e:2x2
jax: 0.10.0
libtpu: 0.0.40
codegen_flags: <defaults>
</compile_context>

<pallas_src>
import functools

import jax
import jax.numpy as jnp
from jax.experimental import pallas as pl
from jax.experimental.pallas import tpu as pltpu

LN_EPS = 1e-5


def _round_up(x, m):
    return ((x + m - 1) // m) * m


# ----------------------------- kernel ------------------------------------- #

def ext_encoder_kernel(x_ref, lbl_ref, w_expr_ref, w_cond_ref,
                       w_heads_ref, b_heads_ref, out_ref):
    # Input layer:  x @ W_expr  +  one_hot(label) @ (W_cond + b_in)
    x = x_ref[...]
    h = jnp.dot(x, w_expr_ref[...], preferred_element_type=jnp.float32)

    tb = x_ref.shape[0]
    ncp = w_cond_ref.shape[0]                      # n_classes padded to 8
    lbl = lbl_ref[...]                             # (tb, 1) int32
    iota = jax.lax.broadcasted_iota(jnp.int32, (tb, ncp), 1)
    onehot = (iota == lbl).astype(w_cond_ref.dtype)
    h = h + jnp.dot(onehot, w_cond_ref[...], preferred_element_type=jnp.float32)

    # LayerNorm(elementwise_affine=False), biased variance, eps inside rsqrt.
    mu = jnp.mean(h, axis=-1, keepdims=True)
    hc = h - mu                                    # hoisted once, reused
    var = jnp.mean(hc * hc, axis=-1, keepdims=True)
    h = jnp.maximum(hc * jax.lax.rsqrt(var + LN_EPS), 0.0)   # LN + ReLU

    # Fused heads [Wm | Wme | Wv | Wve | 0-pad] -> one lane-dense (tb,128) slab.
    out_ref[...] = (jnp.dot(h, w_heads_ref[...],
                            preferred_element_type=jnp.float32)
                    + b_heads_ref[...])


# ----------------------------- wrapper ------------------------------------ #

def ext_encoder_forward(x, batch_labels, packed, *, n_classes, out_dim,
                        tb=128, act_dtype=jnp.float32):
    """x: (B, n_in); batch_labels: (B,) int.  Returns (means, log_vars).

    packed: dict with
      w_expr  (n_in, H)          first-layer expression weights
      w_cond  (NC_PAD, H)        cond weights with the input bias folded in
      w_heads (H, OUT_PAD=128)   [Wm | Wme | Wv | Wve | zeros]
      b_heads (1, OUT_PAD=128)   [bm | bme | bv | bve | zeros]
    """
    del n_classes  # baked into packed["w_cond"]; labels compared in-kernel
    B, n_in = x.shape
    w_expr = packed["w_expr"].astype(act_dtype)
    w_cond = packed["w_cond"]
    w_heads = packed["w_heads"]
    b_heads = packed["b_heads"]
    H = w_expr.shape[1]
    OUT_PAD = w_heads.shape[1]

    x = x.astype(act_dtype)
    lbl = batch_labels.astype(jnp.int32).reshape(B, 1)

    # Batch tile: multiple of 8 sublanes; pad rows only if tb doesn't divide B.
    tb = _round_up(max(8, min(tb, _round_up(B, 8))), 8)
    Bp = _round_up(B, tb)
    if Bp != B:
        x = jnp.pad(x, ((0, Bp - B), (0, 0)))
        lbl = jnp.pad(lbl, ((0, Bp - B), (0, 0)))
    grid = (Bp // tb,)

    def resident(a):
        # Weights stay VMEM-resident across all grid steps.
        return pl.BlockSpec(a.shape, lambda i: tuple(0 for _ in a.shape))

    act_bytes = jnp.dtype(act_dtype).itemsize
    cost = pl.CostEstimate(
        flops=2 * Bp * (n_in * H + w_cond.shape[0] * H + H * OUT_PAD),
        transcendentals=Bp,                                  # one rsqrt per row
        bytes_accessed=(act_bytes * (Bp * n_in + w_expr.size)
                        + 4 * Bp                              # labels
                        + 4 * (w_cond.size + w_heads.size + b_heads.size)
                        + 4 * Bp * OUT_PAD),                  # output slab
    )

    slab = pl.pallas_call(
        ext_encoder_kernel,
        out_shape=jax.ShapeDtypeStruct((Bp, OUT_PAD), jnp.float32),
        grid_spec=pltpu.PrefetchScalarGridSpec(
            num_scalar_prefetch=0,
            grid=grid,
            in_specs=[
                pl.BlockSpec((tb, n_in), lambda i: (i, 0)),
                pl.BlockSpec((tb, 1), lambda i: (i, 0)),
                resident(w_expr),
                resident(w_cond),
                resident(w_heads),
                resident(b_heads),
            ],
            out_specs=pl.BlockSpec((tb, OUT_PAD), lambda i: (i, 0)),
        ),
        compiler_params=pltpu.CompilerParams(
            dimension_semantics=("parallel",),
        ),
        cost_estimate=cost,
    )(x, lbl, w_expr, w_cond, w_heads, b_heads)

    # Slices fuse with the writeback when this wrapper runs under jit.
    means = slab[:B, :out_dim]
    log_vars = slab[:B, out_dim:2 * out_dim]
    return means, log_vars


# ------------------------- reference / params ------------------------------ #

def ext_encoder_reference(x, batch_labels, params, *, n_classes):
    cond = jax.nn.one_hot(batch_labels, n_classes, dtype=x.dtype)
    h = x @ params["w_expr"] + params["b_expr"] + cond @ params["w_cond"]
    mu = jnp.mean(h, axis=-1, keepdims=True)
    var = jnp.mean((h - mu) ** 2, axis=-1, keepdims=True)
    h = (h - mu) / jnp.sqrt(var + LN_EPS)
    h = jnp.maximum(h, 0.0)
    means = jnp.concatenate(
        [h @ params["wm"] + params["bm"], h @ params["wme"] + params["bme"]],
        axis=-1)
    log_vars = jnp.concatenate(
        [h @ params["wv"] + params["bv"], h @ params["wve"] + params["bve"]],
        axis=-1)
    return means, log_vars


def make_params(key, n_in, n_classes, hidden, latent, n_expand):
    ks = jax.random.split(key, 12)

    def lin(k, fan_in, fan_out):
        # deterministic synthetic init (shapes match nn.Linear, pre-transposed)
        scale = 1.0 / jnp.sqrt(jnp.asarray(fan_in, jnp.float32))
        return jax.random.uniform(k, (fan_in, fan_out), jnp.float32, -scale, scale)

    return {
        "w_expr": lin(ks[0], n_in, hidden),
        "b_expr": jax.random.uniform(ks[1], (1, hidden), jnp.float32, -0.1, 0.1),
        "w_cond": lin(ks[2], n_classes, hidden),          # bias=False
        "wm": lin(ks[3], hidden, latent),
        "bm": jax.random.uniform(ks[4], (1, latent), jnp.float32, -0.1, 0.1),
        "wv": lin(ks[5], hidden, latent),
        "bv": jax.random.uniform(ks[6], (1, latent), jnp.float32, -0.1, 0.1),
        "wme": lin(ks[7], hidden, n_expand),
        "bme": jax.random.uniform(ks[8], (1, n_expand), jnp.float32, -0.1, 0.1),
        "wve": lin(ks[9], hidden, n_expand),
        "bve": jax.random.uniform(ks[10], (1, n_expand), jnp.float32, -0.1, 0.1),
    }


def pack_params(params, *, n_classes):
    """One-time host-side packing.

    * input-layer bias folded into the cond rows (the one-hot sums to 1),
      cond rows zero-padded to a sublane multiple (8) for a clean tiny matmul;
    * four head weight/bias blocks concatenated and zero-padded to 128 lanes
      so the kernel emits one unmasked, lane-dense output slab.
    """
    H = params["w_expr"].shape[1]
    nc_pad = _round_up(n_classes, 8)
    w_cond_b = params["w_cond"] + params["b_expr"]        # fold b_in
    w_cond = jnp.zeros((nc_pad, H), jnp.float32).at[:n_classes].set(w_cond_b)

    w_heads = jnp.concatenate(
        [params["wm"], params["wme"], params["wv"], params["wve"]], axis=1)
    b_heads = jnp.concatenate(
        [params["bm"], params["bme"], params["bv"], params["bve"]], axis=1)
    out2 = w_heads.shape[1]
    out_pad = _round_up(out2, 128)
    w_heads = jnp.pad(w_heads, ((0, 0), (0, out_pad - out2)))
    b_heads = jnp.pad(b_heads, ((0, 0), (0, out_pad - out2)))

    return {"w_expr": params["w_expr"], "w_cond": w_cond,
            "w_heads": w_heads, "b_heads": b_heads}


if __name__ == "__main__":
    B, n_in, n_classes, hidden, latent, n_expand = 512, 32, 3, 64, 16, 8
    out_dim = latent + n_expand

    key = jax.random.PRNGKey(0)
    kx, kb, kp = jax.random.split(key, 3)

    x = jax.random.normal(kx, (B, n_in), jnp.float32)
    batch_labels = jax.random.randint(kb, (B,), 0, n_classes, jnp.int32)
    params = make_params(kp, n_in, n_classes, hidden, latent, n_expand)
    packed = pack_params(params, n_classes=n_classes)

    means_ref, log_vars_ref = ext_encoder_reference(
        x, batch_labels, params, n_classes=n_classes)

    # f32 path: B=512, tb=128 -> 4 "parallel" grid steps (>=2 per v7x TC so
    # DMA overlaps compute; single-TC v5e/v6e can sweep tb up to 512/1024).
    fwd_f32 = jax.jit(functools.partial(
        ext_encoder_forward, n_classes=n_classes, out_dim=out_dim, tb=128))
    means, log_vars = fwd_f32(x, batch_labels, packed)
    jax.block_until_ready((means, log_vars))

    assert means.shape == (B, out_dim)
    assert log_vars.shape == (B, out_dim)
    assert jnp.allclose(means, means_ref, atol=1e-4, rtol=1e-4)
    assert jnp.allclose(log_vars, log_vars_ref, atol=1e-4, rtol=1e-4)

    # bf16 activation stream (halves dominant HBM read; f32 accumulation/LN).
    fwd_bf16 = jax.jit(functools.partial(
        ext_encoder_forward, n_classes=n_classes, out_dim=out_dim, tb=128,
        act_dtype=jnp.bfloat16))
    means_h, log_vars_h = fwd_bf16(x, batch_labels, packed)
    jax.block_until_ready((means_h, log_vars_h))
    assert jnp.allclose(means_h, means_ref, atol=7.5e-2, rtol=7.5e-2)
    assert jnp.allclose(log_vars_h, log_vars_ref, atol=7.5e-2, rtol=7.5e-2)

    print("KERNEL_OK")
</pallas_src>

<mosaic_0001>
module attributes {stable_mosaic.version = 11 : i64} {
  func.func @ext_encoder_kernel(%arg0: i32, %arg1: memref<128x32xf32, #tpu.memory_space<vmem>>, %arg2: memref<128x1xi32, #tpu.memory_space<vmem>>, %arg3: memref<32x64xf32, #tpu.memory_space<vmem>>, %arg4: memref<8x64xf32, #tpu.memory_space<vmem>>, %arg5: memref<64x128xf32, #tpu.memory_space<vmem>>, %arg6: memref<1x128xf32, #tpu.memory_space<vmem>>, %arg7: memref<128x128xf32, #tpu.memory_space<vmem>>) attributes {dimension_semantics = [#tpu.dimension_semantics<parallel>], iteration_bounds = array<i64: 4>, scalar_prefetch = 0 : i64, scratch_operands = 0 : i64, tpu.core_type = #tpu.core_type<tc>, window_params = [{transform_indices = @transform_0, window_bounds = array<i64: 128, 32>}, {transform_indices = @transform_1, window_bounds = array<i64: 128, 1>}, {pipeline_mode = #tpu.pipeline_mode<synchronous>, transform_indices = @transform_2, window_bounds = array<i64: 32, 64>}, {pipeline_mode = #tpu.pipeline_mode<synchronous>, transform_indices = @transform_3, window_bounds = array<i64: 8, 64>}, {pipeline_mode = #tpu.pipeline_mode<synchronous>, transform_indices = @transform_4, window_bounds = array<i64: 64, 128>}, {pipeline_mode = #tpu.pipeline_mode<synchronous>, transform_indices = @transform_5, window_bounds = array<i64: 1, 128>}, {transform_indices = @transform_6, window_bounds = array<i64: 128, 128>}]} {
    %c0 = arith.constant 0 : index
    %c0_0 = arith.constant 0 : index
    %0 = vector.load %arg1[%c0, %c0_0] : memref<128x32xf32, #tpu.memory_space<vmem>>, vector<128x32xf32>
    %c0_1 = arith.constant 0 : index
    %c0_2 = arith.constant 0 : index
    %1 = vector.load %arg3[%c0_1, %c0_2] : memref<32x64xf32, #tpu.memory_space<vmem>>, vector<32x64xf32>
    %cst = arith.constant dense<0.000000e+00> : vector<128x64xf32>
    %2 = tpu.matmul %0, %1, %cst {dimension_numbers = #tpu.dot_dimension_numbers<[1], [0], [0], [1], [0, 0, 1, 1], [], []>} : vector<128x32xf32>, vector<32x64xf32>, vector<128x64xf32> -> vector<128x64xf32>
    %c0_3 = arith.constant 0 : index
    %c0_4 = arith.constant 0 : index
    %3 = vector.load %arg2[%c0_3, %c0_4] : memref<128x1xi32, #tpu.memory_space<vmem>>, vector<128x1xi32>
    %4 = tpu.iota {dimensions = array<i32: 1>} : vector<128x8xi32>
    %5 = vector.broadcast %3 : vector<128x1xi32> to vector<128x8xi32>
    %6 = arith.cmpi eq, %4, %5 : vector<128x8xi32>
    %7 = arith.extui %6 : vector<128x8xi1> to vector<128x8xi32>
    %8 = arith.sitofp %7 : vector<128x8xi32> to vector<128x8xf32>
    %c0_5 = arith.constant 0 : index
    %c0_6 = arith.constant 0 : index
    %9 = vector.load %arg4[%c0_5, %c0_6] : memref<8x64xf32, #tpu.memory_space<vmem>>, vector<8x64xf32>
    %cst_7 = arith.constant dense<0.000000e+00> : vector<128x64xf32>
    %10 = tpu.matmul %8, %9, %cst_7 {dimension_numbers = #tpu.dot_dimension_numbers<[1], [0], [0], [1], [0, 0, 1, 1], [], []>} : vector<128x8xf32>, vector<8x64xf32>, vector<128x64xf32> -> vector<128x64xf32>
    %11 = arith.addf %2, %10 : vector<128x64xf32>
    %cst_8 = arith.constant dense<0.000000e+00> : vector<128xf32>
    %12 = vector.multi_reduction <add>, %11, %cst_8 [1] : vector<128x64xf32> to vector<128xf32>
    %13 = vector.shape_cast %12 : vector<128xf32> to vector<128x1xf32>
    %cst_9 = arith.constant 6.400000e+01 : f32
    %14 = vector.broadcast %cst_9 : f32 to vector<128x1xf32>
    %15 = arith.divf %13, %14 : vector<128x1xf32>
    %16 = vector.broadcast %15 : vector<128x1xf32> to vector<128x64xf32>
    %17 = arith.subf %11, %16 : vector<128x64xf32>
    %18 = arith.mulf %17, %17 : vector<128x64xf32>
    %cst_10 = arith.constant dense<0.000000e+00> : vector<128xf32>
    %19 = vector.multi_reduction <add>, %18, %cst_10 [1] : vector<128x64xf32> to vector<128xf32>
    %20 = vector.shape_cast %19 : vector<128xf32> to vector<128x1xf32>
    %cst_11 = arith.constant 6.400000e+01 : f32
    %21 = vector.broadcast %cst_11 : f32 to vector<128x1xf32>
    %22 = arith.divf %20, %21 : vector<128x1xf32>
    %cst_12 = arith.constant 9.99999974E-6 : f32
    %23 = vector.broadcast %cst_12 : f32 to vector<128x1xf32>
    %24 = arith.addf %22, %23 : vector<128x1xf32>
    %25 = math.rsqrt %24 : vector<128x1xf32>
    %26 = vector.broadcast %25 : vector<128x1xf32> to vector<128x64xf32>
    %27 = arith.mulf %17, %26 : vector<128x64xf32>
    %cst_13 = arith.constant 0.000000e+00 : f32
    %28 = vector.broadcast %cst_13 : f32 to vector<128x64xf32>
    %29 = arith.maximumf %27, %28 : vector<128x64xf32>
    %c0_14 = arith.constant 0 : index
    %c0_15 = arith.constant 0 : index
    %30 = vector.load %arg5[%c0_14, %c0_15] : memref<64x128xf32, #tpu.memory_space<vmem>>, vector<64x128xf32>
    %cst_16 = arith.constant dense<0.000000e+00> : vector<128x128xf32>
    %31 = tpu.matmul %29, %30, %cst_16 {dimension_numbers = #tpu.dot_dimension_numbers<[1], [0], [0], [1], [0, 0, 1, 1], [], []>} : vector<128x64xf32>, vector<64x128xf32>, vector<128x128xf32> -> vector<128x128xf32>
    %c0_17 = arith.constant 0 : index
    %c0_18 = arith.constant 0 : index
    %32 = vector.load %arg6[%c0_17, %c0_18] : memref<1x128xf32, #tpu.memory_space<vmem>>, vector<1x128xf32>
    %33 = vector.broadcast %32 : vector<1x128xf32> to vector<128x128xf32>
    %34 = arith.addf %31, %33 : vector<128x128xf32>
    %c0_19 = arith.constant 0 : index
    %c0_20 = arith.constant 0 : index
    %35 = vector.load %arg7[%c0_19, %c0_20] : memref<128x128xf32, #tpu.memory_space<vmem>>, vector<128x128xf32>
    tpu.vector_store %arg7[%c0_19, %c0_20], %34 {strides = array<i32>} : memref<128x128xf32, #tpu.memory_space<vmem>>, vector<128x128xf32>,
    return
  }
  func.func @transform_0(%arg0: i32) -> (i32, i32) {
    %c0_i32 = arith.constant 0 : i32
    %c0_i32_0 = arith.constant 0 : i32
    return %arg0, %c0_i32 : i32, i32
  }
  func.func @transform_1(%arg0: i32) -> (i32, i32) {
    %c0_i32 = arith.constant 0 : i32
    %c0_i32_0 = arith.constant 0 : i32
    return %arg0, %c0_i32 : i32, i32
  }
  func.func @transform_2(%arg0: i32) -> (i32, i32) {
    %c0_i32 = arith.constant 0 : i32
    %c0_i32_0 = arith.constant 0 : i32
    %c0_i32_1 = arith.constant 0 : i32
    return %c0_i32, %c0_i32_0 : i32, i32
  }
  func.func @transform_3(%arg0: i32) -> (i32, i32) {
    %c0_i32 = arith.constant 0 : i32
    %c0_i32_0 = arith.constant 0 : i32
    %c0_i32_1 = arith.constant 0 : i32
    return %c0_i32, %c0_i32_0 : i32, i32
  }
  func.func @transform_4(%arg0: i32) -> (i32, i32) {
    %c0_i32 = arith.constant 0 : i32
    %c0_i32_0 = arith.constant 0 : i32
    %c0_i32_1 = arith.constant 0 : i32
    return %c0_i32, %c0_i32_0 : i32, i32
  }
  func.func @transform_5(%arg0: i32) -> (i32, i32) {
    %c0_i32 = arith.constant 0 : i32
    %c0_i32_0 = arith.constant 0 : i32
    %c0_i32_1 = arith.constant 0 : i32
    return %c0_i32, %c0_i32_0 : i32, i32
  }
  func.func @transform_6(%arg0: i32) -> (i32, i32) {
    %c0_i32 = arith.constant 0 : i32
    %c0_i32_0 = arith.constant 0 : i32
    return %arg0, %c0_i32 : i32, i32
  }
}

</mosaic_0001>

<llo_original>
// kernel: ext_encoder_forward.1
$region0: #{ext_encoder_forward.1}
  #allocation0 [shape = 'u32[]', space=smem, size = 0x4, offset = 0x4, fixed_abs, tag = 'smem constant byte address 0x4 - core index']
  #allocation1 [shape = 'u32[72,128]{1,0:T(1,128)}', space=vmem, size = 0x9000, scoped, tag = 'internal scratch']
  %s0 = inlined_call_operand.vmem [shape: f32[512,32], index: 0, kind: input, shape index: {}]
  %s1 = inlined_call_operand.vmem [shape: s32[512,1], index: 1, kind: input, shape index: {}]
  %s2 = inlined_call_operand.vmem [shape: f32[32,64], index: 2, kind: input, shape index: {}]
  %s3 = inlined_call_operand.vmem [shape: f32[8,64], index: 3, kind: input, shape index: {}]
  %s4 = inlined_call_operand.vmem [shape: f32[64,128], index: 4, kind: input, shape index: {}]
  %s5 = inlined_call_operand.vmem [shape: f32[1,128], index: 5, kind: input, shape index: {}]
  %s6 = inlined_call_operand.vmem [shape: f32[512,128], index: 6, kind: output, shape index: {}]
  %s7 = sld [smem:[#allocation0]]
  $region57: #{ext_encoder_forward.1} parent=0
    _
  %s9 = ssub.s32 1, %s7
  %s10 = scalar_select 0, %s9, %s7
  loop: start=0, step=1, limit=6
  $region2: #{ext_encoder_forward.1} parent=0 // loop_pre_header
    _
  $region3: #{ext_encoder_forward.1} parent=0 // loop_header
    %s12 = sphi 0, %s16
    %p13 = scmp.ge.s32.totalorder %s12, 6
    %s22 = sphi 0, %s24
    %s25 = sphi 0, %s22
    %s26 = sphi 0, %s25
    %s42 = sphi 0, %s26
    %s48 = sphi 0, %s50
    %s51 = sphi 0, %s48
    %s52 = sphi 0, %s51
    %s68 = sphi 0, %s52
    %s72 = sphi 0, %s72
    %s74 = sphi 0, %s72
    %s75 = sphi 0, %s74
    %s89 = sphi 0, %s75
    %s93 = sphi 0, %s93
    %s95 = sphi 0, %s93
    %s96 = sphi 0, %s95
    %s110 = sphi 0, %s96
    %s114 = sphi 0, %s114
    %s116 = sphi 0, %s114
    %s117 = sphi 0, %s116
    %s131 = sphi 0, %s117
    %s135 = sphi 0, %s135
    %s137 = sphi 0, %s135
    %s138 = sphi 0, %s137
    %s152 = sphi 0, %s138
    %s158 = sphi 0, %s160
    %s161 = sphi 0, %s158
    %s162 = sphi 0, %s161
    %s178 = sphi 0, %s162
  $region4: #{ext_encoder_forward.1} parent=0 // loop_header_branch
    %15 = sbr.rel (%p13) target = $region8
  $region5: #{ext_encoder_forward.1} parent=0 // loop_body
    %s17 = ssub.s32 %s12, 1
    %s18 = ssub.s32 %s12, 2
    %s19 = sadd.s32 %s12, 1
    %s20 = ssub.s32 %s12, %s19
    %p21 = scmp.eq.s32.totalorder %s20, 0
    %s23 = sadd.s32 %s22, 1
    %s24 = scalar_select %p21, %s22, %s23
    %p27 = pneg %p21
    %p28 = scmp.eq.s32.totalorder %s12, 3
    %p29 = por %p27, %p28
    %p30 = scmp.ne.s32.totalorder %s22, %s25
    %p31 = scmp.eq.s32.totalorder %s12, 0
    %p32 = por %p30, %p31
    %p33 = scmp.ne.s32.totalorder %s22, %s25
    %p34 = scmp.eq.s32.totalorder %s17, 3
    %p35 = por %p33, %p34
    %p36 = scmp.ne.s32.totalorder %s25, %s26
    %p37 = scmp.eq.s32.totalorder %s17, 0
    %p38 = por %p36, %p37
    %p39 = scmp.ne.s32.totalorder %s25, %s26
    %p40 = scmp.eq.s32.totalorder %s18, 3
    %p41 = por %p39, %p40
    %p43 = scmp.ne.s32.totalorder %s26, %s42
    %p44 = scmp.eq.s32.totalorder %s18, 0
    %p45 = por %p43, %p44
    %s46 = ssub.s32 %s12, %s19
    %p47 = scmp.eq.s32.totalorder %s46, 0
    %s49 = sadd.s32 %s48, 1
    %s50 = scalar_select %p47, %s48, %s49
    %p53 = pneg %p47
    %p54 = scmp.eq.s32.totalorder %s12, 3
    %p55 = por %p53, %p54
    %p56 = scmp.ne.s32.totalorder %s48, %s51
    %p57 = scmp.eq.s32.totalorder %s12, 0
    %p58 = por %p56, %p57
    %p59 = scmp.ne.s32.totalorder %s48, %s51
    %p60 = scmp.eq.s32.totalorder %s17, 3
    %p61 = por %p59, %p60
    %p62 = scmp.ne.s32.totalorder %s51, %s52
    %p63 = scmp.eq.s32.totalorder %s17, 0
    %p64 = por %p62, %p63
    %p65 = scmp.ne.s32.totalorder %s51, %s52
    %p66 = scmp.eq.s32.totalorder %s18, 3
    %p67 = por %p65, %p66
    %p69 = scmp.ne.s32.totalorder %s52, %s68
    %p70 = scmp.eq.s32.totalorder %s18, 0
    %p71 = por %p69, %p70
    %s73 = sadd.s32 %s72, 1
    %p76 = scmp.eq.s32.totalorder %s12, 3
    %p77 = scmp.ne.s32.totalorder %s72, %s74
    %p78 = scmp.eq.s32.totalorder %s12, 0
    %p79 = por %p77, %p78
    %p80 = scmp.ne.s32.totalorder %s72, %s74
    %p81 = scmp.eq.s32.totalorder %s17, 3
    %p82 = por %p80, %p81
    %p83 = scmp.ne.s32.totalorder %s74, %s75
    %p84 = scmp.eq.s32.totalorder %s17, 0
    %p85 = por %p83, %p84
    %p86 = scmp.ne.s32.totalorder %s74, %s75
    %p87 = scmp.eq.s32.totalorder %s18, 3
    %p88 = por %p86, %p87
    %p90 = scmp.ne.s32.totalorder %s75, %s89
    %p91 = scmp.eq.s32.totalorder %s18, 0
    %p92 = por %p90, %p91
    %s94 = sadd.s32 %s93, 1
    %p97 = scmp.eq.s32.totalorder %s12, 3
    %p98 = scmp.ne.s32.totalorder %s93, %s95
    %p99 = scmp.eq.s32.totalorder %s12, 0
    %p100 = por %p98, %p99
    %p101 = scmp.ne.s32.totalorder %s93, %s95
    %p102 = scmp.eq.s32.totalorder %s17, 3
    %p103 = por %p101, %p102
    %p104 = scmp.ne.s32.totalorder %s95, %s96
    %p105 = scmp.eq.s32.totalorder %s17, 0
    %p106 = por %p104, %p105
    %p107 = scmp.ne.s32.totalorder %s95, %s96
    %p108 = scmp.eq.s32.totalorder %s18, 3
    %p109 = por %p107, %p108
    %p111 = scmp.ne.s32.totalorder %s96, %s110
    %p112 = scmp.eq.s32.totalorder %s18, 0
    %p113 = por %p111, %p112
    %s115 = sadd.s32 %s114, 1
    %p118 = scmp.eq.s32.totalorder %s12, 3
    %p119 = scmp.ne.s32.totalorder %s114, %s116
    %p120 = scmp.eq.s32.totalorder %s12, 0
    %p121 = por %p119, %p120
    %p122 = scmp.ne.s32.totalorder %s114, %s116
    %p123 = scmp.eq.s32.totalorder %s17, 3
    %p124 = por %p122, %p123
    %p125 = scmp.ne.s32.totalorder %s116, %s117
    %p126 = scmp.eq.s32.totalorder %s17, 0
    %p127 = por %p125, %p126
    %p128 = scmp.ne.s32.totalorder %s116, %s117
    %p129 = scmp.eq.s32.totalorder %s18, 3
    %p130 = por %p128, %p129
    %p132 = scmp.ne.s32.totalorder %s117, %s131
    %p133 = scmp.eq.s32.totalorder %s18, 0
    %p134 = por %p132, %p133
    %s136 = sadd.s32 %s135, 1
    %p139 = scmp.eq.s32.totalorder %s12, 3
    %p140 = scmp.ne.s32.totalorder %s135, %s137
    %p141 = scmp.eq.s32.totalorder %s12, 0
    %p142 = por %p140, %p141
    %p143 = scmp.ne.s32.totalorder %s135, %s137
    %p144 = scmp.eq.s32.totalorder %s17, 3
    %p145 = por %p143, %p144
    %p146 = scmp.ne.s32.totalorder %s137, %s138
    %p147 = scmp.eq.s32.totalorder %s17, 0
    %p148 = por %p146, %p147
    %p149 = scmp.ne.s32.totalorder %s137, %s138
    %p150 = scmp.eq.s32.totalorder %s18, 3
    %p151 = por %p149, %p150
    %p153 = scmp.ne.s32.totalorder %s138, %s152
    %p154 = scmp.eq.s32.totalorder %s18, 0
    %p155 = por %p153, %p154
    %s156 = ssub.s32 %s12, %s19
    %p157 = scmp.eq.s32.totalorder %s156, 0
    %s159 = sadd.s32 %s158, 1
    %s160 = scalar_select %p157, %s158, %s159
    %p163 = pneg %p157
    %p164 = scmp.eq.s32.totalorder %s12, 3
    %p165 = por %p163, %p164
    %p166 = scmp.ne.s32.totalorder %s158, %s161
    %p167 = scmp.eq.s32.totalorder %s12, 0
    %p168 = por %p166, %p167
    %p169 = scmp.ne.s32.totalorder %s158, %s161
    %p170 = scmp.eq.s32.totalorder %s17, 3
    %p171 = por %p169, %p170
    %p172 = scmp.ne.s32.totalorder %s161, %s162
    %p173 = scmp.eq.s32.totalorder %s17, 0
    %p174 = por %p172, %p173
    %p175 = scmp.ne.s32.totalorder %s161, %s162
    %p176 = scmp.eq.s32.totalorder %s18, 3
    %p177 = por %p175, %p176
    %p179 = scmp.ne.s32.totalorder %s162, %s178
    %p180 = scmp.eq.s32.totalorder %s18, 0
    %p181 = por %p179, %p180
    %p182 = scmp.le.s32.totalorder 1, %s12
    %p183 = scmp.lt.s32.totalorder %s12, 5
    %p184 = pnand %p182, %p183
    %p185 = pneg %p184
    // Predicated region
    $region9: #{ext_encoder_forward.1} parent=5 // pred_check
      _
    $region10: #{ext_encoder_forward.1} parent=5 // pred_check_branch
      %187 = sbr.rel (%p184) target = $region12
    $region11: #{ext_encoder_forward.1} parent=5 // pred_region
      %s188 = ssub.s32 %s12, 1
      // Predicated region
      $region13: #{ext_encoder_forward.1} parent=11 // pred_check
        %p189 = pneg %p85
      $region14: #{ext_encoder_forward.1} parent=11 // pred_check_branch
        %191 = sbr.rel (%p189) target = $region16
      $region15: #{ext_encoder_forward.1} parent=11 // pred_region
        _
      $region16: #{ext_encoder_forward.1} parent=11 // pred_fallthru
        _
      // Predicated region
      $region17: #{ext_encoder_forward.1} parent=11 // pred_check
        %p192 = pneg %p106
      $region18: #{ext_encoder_forward.1} parent=11 // pred_check_branch
        %194 = sbr.rel (%p192) target = $region20
      $region19: #{ext_encoder_forward.1} parent=11 // pred_region
        _
      $region20: #{ext_encoder_forward.1} parent=11 // pred_fallthru
        _
      // Predicated region
      $region21: #{ext_encoder_forward.1} parent=11 // pred_check
        %p195 = pneg %p127
      $region22: #{ext_encoder_forward.1} parent=11 // pred_check_branch
        %197 = sbr.rel (%p195) target = $region24
      $region23: #{ext_encoder_forward.1} parent=11 // pred_region
        _
      $region24: #{ext_encoder_forward.1} parent=11 // pred_fallthru
        _
      // Predicated region
      $region25: #{ext_encoder_forward.1} parent=11 // pred_check
        %p198 = pneg %p148
      $region26: #{ext_encoder_forward.1} parent=11 // pred_check_branch
        %200 = sbr.rel (%p198) target = $region28
      $region27: #{ext_encoder_forward.1} parent=11 // pred_region
        _
      $region28: #{ext_encoder_forward.1} parent=11 // pred_fallthru
        _
    $region12: #{ext_encoder_forward.1} parent=5 // pred_fallthru
      _
    %p201 = scmp.lt.s32.totalorder %s12, 4
    // Predicated region
    $region29: #{ext_encoder_forward.1} parent=5 // pred_check
      %p202 = pneg %p201
    $region30: #{ext_encoder_forward.1} parent=5 // pred_check_branch
      %204 = sbr.rel (%p202) target = $region32
    $region31: #{ext_encoder_forward.1} parent=5 // pred_region
      // Predicated region
      $region33: #{ext_encoder_forward.1} parent=31 // pred_check
        %p205 = pneg %p32
      $region34: #{ext_encoder_forward.1} parent=31 // pred_check_branch
        %207 = sbr.rel (%p205) target = $region36
      $region35: #{ext_encoder_forward.1} parent=31 // pred_region
        %s208 = smul.u32 16, %s12
        %p209 = scmp.lt.s32.totalorder %s208, 63
        %s210 = scalar_select %p209, %s208, 63
        %s211 = smul.addr %s210, 8
        %s212 = scalar_lea.vmem %s0, %s211
        %s213 = smul.u32 16, %s12
      $region36: #{ext_encoder_forward.1} parent=31 // pred_fallthru
        _
      // Predicated region
      $region37: #{ext_encoder_forward.1} parent=31 // pred_check
        %p214 = pneg %p58
      $region38: #{ext_encoder_forward.1} parent=31 // pred_check_branch
        %216 = sbr.rel (%p214) target = $region40
      $region39: #{ext_encoder_forward.1} parent=31 // pred_region
        %s217 = smul.u32 16, %s12
        %p218 = scmp.lt.s32.totalorder %s217, 63
        %s219 = scalar_select %p218, %s217, 63
        %s220 = smul.addr %s219, 8
        %s221 = scalar_lea.vmem %s1, %s220
        %s222 = smul.u32 16, %s12
      $region40: #{ext_encoder_forward.1} parent=31 // pred_fallthru
        _
    $region32: #{ext_encoder_forward.1} parent=5 // pred_fallthru
      _
    %p223 = scmp.le.s32.totalorder 1, %s12
    %p224 = scmp.lt.s32.totalorder %s12, 5
    %p225 = pnand %p223, %p224
    %p226 = pneg %p225
    // Predicated region
    $region41: #{ext_encoder_forward.1} parent=5 // pred_check
      _
    $region42: #{ext_encoder_forward.1} parent=5 // pred_check_branch
      %228 = sbr.rel (%p225) target = $region44
    $region43: #{ext_encoder_forward.1} parent=5 // pred_region
      %s229 = ssub.s32 %s12, 1
      %s230 = smul.u32 16, %s17
      %p231 = scmp.lt.s32.totalorder %s230, 63
      %s232 = scalar_select %p231, %s230, 63
      %s233 = smul.addr %s232, 8
      %s234 = scalar_lea.vmem %s0, %s233
      %p235 = pneg %p38
      %p236 = pneg %p35
      %s237 = smul.u32 16, %s17
      %p238 = scmp.lt.s32.totalorder %s237, 63
      %s239 = scalar_select %p238, %s237, 63
      %s240 = smul.addr %s239, 8
      %s241 = scalar_lea.vmem %s1, %s240
      %p242 = pneg %p64
      %p243 = pneg %p61
      %p244 = pneg %p85
      %p245 = pneg %p82
      %p246 = pneg %p106
      %p247 = pneg %p103
      %p248 = pneg %p127
      %p249 = pneg %p124
      %p250 = pneg %p148
      %p251 = pneg %p145
      %p252 = pneg %p174
      %p253 = pneg %p171
      %s254 = smul.u32 16, %s17
      %p255 = scmp.lt.s32.totalorder %s254, 63
      %s256 = scalar_select %p255, %s254, 63
      %s257 = smul.addr %s256, 8
      %s258 = scalar_lea.vmem %s6, %s257
      %s259 = smul.u32 16, %s17
      %p260 = scmp.lt.s32.totalorder %s259, 63
      %s261 = scalar_select %p260, %s259, 63
      %s262 = smul.addr %s261, 8
      %s263 = scalar_lea.vmem %s0, %s262
      %s264 = smul.u32 16, %s17
      %s265 = smul.u32 16, %s17
      %p266 = scmp.lt.s32.totalorder %s265, 63
      %s267 = scalar_select %p266, %s265, 63
      %s268 = smul.addr %s267, 8
      %s269 = scalar_lea.vmem %s1, %s268
      %s270 = smul.u32 16, %s17
      %s271 = smul.u32 16, %s17
      %p272 = scmp.lt.s32.totalorder %s271, 63
      %s273 = scalar_select %p272, %s271, 63
      %s274 = smul.addr %s273, 8
      %s275 = scalar_lea.vmem %s6, %s274
      %s276 = smul.u32 16, %s17
      %v277 = vld [vmem:[%s263] sm:$0xff]
      %v278 = vld [vmem:[%s263 + $0x8] sm:$0xff]
      %v279 = vld [vmem:[%s263 + $0x10] sm:$0xff]
      %v280 = vld [vmem:[%s263 + $0x18] sm:$0xff]
      %v281 = vld [vmem:[%s263 + $0x20] sm:$0xff]
      %v282 = vld [vmem:[%s263 + $0x28] sm:$0xff]
      %v283 = vld [vmem:[%s263 + $0x30] sm:$0xff]
      %v284 = vld [vmem:[%s263 + $0x38] sm:$0xff]
      %v285 = vld [vmem:[%s263 + $0x40] sm:$0xff]
      %v286 = vld [vmem:[%s263 + $0x48] sm:$0xff]
      %v287 = vld [vmem:[%s263 + $0x50] sm:$0xff]
      %v288 = vld [vmem:[%s263 + $0x58] sm:$0xff]
      %v289 = vld [vmem:[%s263 + $0x60] sm:$0xff]
      %v290 = vld [vmem:[%s263 + $0x68] sm:$0xff]
      %v291 = vld [vmem:[%s263 + $0x70] sm:$0xff]
      %v292 = vld [vmem:[%s263 + $0x78] sm:$0xff]
      %v293 = vld [vmem:[%s2] sm:$0xff]
      %v294 = vld [vmem:[%s2 + $0x8] sm:$0xff]
      %v295 = vld [vmem:[%s2 + $0x10] sm:$0xff]
      %v296 = vld [vmem:[%s2 + $0x18] sm:$0xff]
      %v297 = vld [vmem:[%s269] sm:$0xff]
      %v298 = vld [vmem:[%s269 + $0x8] sm:$0xff]
      %v299 = vld [vmem:[%s269 + $0x10] sm:$0xff]
      %v300 = vld [vmem:[%s269 + $0x18] sm:$0xff]
      %v301 = vld [vmem:[%s269 + $0x20] sm:$0xff]
      %v302 = vld [vmem:[%s269 + $0x28] sm:$0xff]
      %v303 = vld [vmem:[%s269 + $0x30] sm:$0xff]
      %v304 = vld [vmem:[%s269 + $0x38] sm:$0xff]
      %v305 = vld [vmem:[%s269 + $0x40] sm:$0xff]
      %v306 = vld [vmem:[%s269 + $0x48] sm:$0xff]
      %v307 = vld [vmem:[%s269 + $0x50] sm:$0xff]
      %v308 = vld [vmem:[%s269 + $0x58] sm:$0xff]
      %v309 = vld [vmem:[%s269 + $0x60] sm:$0xff]
      %v310 = vld [vmem:[%s269 + $0x68] sm:$0xff]
      %v311 = vld [vmem:[%s269 + $0x70] sm:$0xff]
      %v312 = vld [vmem:[%s269 + $0x78] sm:$0xff]
      %v313 = vlaneseq
      %v314 = vand.u32 %v313, 127
      %315 = vset.pattern.permute.xlu0 0
      %316 = vperm.xlu0 %315, %v297
      %v317 = vpop.permute.xlu0 %316
      %318 = vset.pattern.permute.xlu0 0
      %319 = vperm.xlu0 %318, %v298
      %v320 = vpop.permute.xlu0 %319
      %321 = vset.pattern.permute.xlu0 0
      %322 = vperm.xlu0 %321, %v299
      %v323 = vpop.permute.xlu0 %322
      %324 = vset.pattern.permute.xlu0 0
      %325 = vperm.xlu0 %324, %v300
      %v326 = vpop.permute.xlu0 %325
      %327 = vset.pattern.permute.xlu0 0
      %328 = vperm.xlu0 %327, %v301
      %v329 = vpop.permute.xlu0 %328
      %330 = vset.pattern.permute.xlu0 0
      %331 = vperm.xlu0 %330, %v302
      %v332 = vpop.permute.xlu0 %331
      %333 = vset.pattern.permute.xlu0 0
      %334 = vperm.xlu0 %333, %v303
      %v335 = vpop.permute.xlu0 %334
      %336 = vset.pattern.permute.xlu0 0
      %337 = vperm.xlu0 %336, %v304
      %v338 = vpop.permute.xlu0 %337
      %339 = vset.pattern.permute.xlu0 0
      %340 = vperm.xlu0 %339, %v305
      %v341 = vpop.permute.xlu0 %340
      %342 = vset.pattern.permute.xlu0 0
      %343 = vperm.xlu0 %342, %v306
      %v344 = vpop.permute.xlu0 %343
      %345 = vset.pattern.permute.xlu0 0
      %346 = vperm.xlu0 %345, %v307
      %v347 = vpop.permute.xlu0 %346
      %348 = vset.pattern.permute.xlu0 0
      %349 = vperm.xlu0 %348, %v308
      %v350 = vpop.permute.xlu0 %349
      %351 = vset.pattern.permute.xlu0 0
      %352 = vperm.xlu0 %351, %v309
      %v353 = vpop.permute.xlu0 %352
      %354 = vset.pattern.permute.xlu0 0
      %355 = vperm.xlu0 %354, %v310
      %v356 = vpop.permute.xlu0 %355
      %357 = vset.pattern.permute.xlu0 0
      %358 = vperm.xlu0 %357, %v311
      %v359 = vpop.permute.xlu0 %358
      %360 = vset.pattern.permute.xlu0 0
      %361 = vperm.xlu0 %360, %v312
      %v362 = vpop.permute.xlu0 %361
      %vm363 = vcmp.eq.s32.totalorder %v314, %v317
      %vm364 = vcmp.eq.s32.totalorder %v314, %v320
      %vm365 = vcmp.eq.s32.totalorder %v314, %v323
      %vm366 = vcmp.eq.s32.totalorder %v314, %v326
      %vm367 = vcmp.eq.s32.totalorder %v314, %v329
      %vm368 = vcmp.eq.s32.totalorder %v314, %v332
      %vm369 = vcmp.eq.s32.totalorder %v314, %v335
      %vm370 = vcmp.eq.s32.totalorder %v314, %v338
      %vm371 = vcmp.eq.s32.totalorder %v314, %v341
      %vm372 = vcmp.eq.s32.totalorder %v314, %v344
      %vm373 = vcmp.eq.s32.totalorder %v314, %v347
      %vm374 = vcmp.eq.s32.totalorder %v314, %v350
      %vm375 = vcmp.eq.s32.totalorder %v314, %v353
      %vm376 = vcmp.eq.s32.totalorder %v314, %v356
      %vm377 = vcmp.eq.s32.totalorder %v314, %v359
      %vm378 = vcmp.eq.s32.totalorder %v314, %v362
      %v379 = vsel %vm363, 1, 0
      %v380 = vsel %vm364, 1, 0
      %v381 = vsel %vm365, 1, 0
      %v382 = vsel %vm366, 1, 0
      %v383 = vsel %vm367, 1, 0
      %v384 = vsel %vm368, 1, 0
      %v385 = vsel %vm369, 1, 0
      %v386 = vsel %vm370, 1, 0
      %v387 = vsel %vm371, 1, 0
      %v388 = vsel %vm372, 1, 0
      %v389 = vsel %vm373, 1, 0
      %v390 = vsel %vm374, 1, 0
      %v391 = vsel %vm375, 1, 0
      %v392 = vsel %vm376, 1, 0
      %v393 = vsel %vm377, 1, 0
      %v394 = vsel %vm378, 1, 0
      %v395 = vcvt.s32.f32 %v379
      %v396 = vcvt.s32.f32 %v380
      %v397 = vcvt.s32.f32 %v381
      %v398 = vcvt.s32.f32 %v382
      %v399 = vcvt.s32.f32 %v383
      %v400 = vcvt.s32.f32 %v384
      %v401 = vcvt.s32.f32 %v385
      %v402 = vcvt.s32.f32 %v386
      %v403 = vcvt.s32.f32 %v387
      %v404 = vcvt.s32.f32 %v388
      %v405 = vcvt.s32.f32 %v389
      %v406 = vcvt.s32.f32 %v390
      %v407 = vcvt.s32.f32 %v391
      %v408 = vcvt.s32.f32 %v392
      %v409 = vcvt.s32.f32 %v393
      %v410 = vcvt.s32.f32 %v394
      %v411 = vld [vmem:[%s3] sm:$0xff]
      %vm412 = vcmask 64512
      %v414 = vsel %vm412, %v395, 0
      %v417 = vsel %vm412, %v396, 0
      %v420 = vsel %vm412, %v397, 0
      %v423 = vsel %vm412, %v398, 0
      %v426 = vsel %vm412, %v399, 0
      %v429 = vsel %vm412, %v400, 0
      %v432 = vsel %vm412, %v401, 0
      %v435 = vsel %vm412, %v402, 0
      %v438 = vsel %vm412, %v403, 0
      %v441 = vsel %vm412, %v404, 0
      %v444 = vsel %vm412, %v405, 0
      %v447 = vsel %vm412, %v406, 0
      %v450 = vsel %vm412, %v407, 0
      %v453 = vsel %vm412, %v408, 0
      %v456 = vsel %vm412, %v409, 0
      %v459 = vsel %vm412, %v410, 0
      %461 = vmatpush.msra.mxu0 0.0
      %462 = vmatpush.msra.mxu0 0.0
      %463 = vmatpush.msra.mxu0 0.0
      %464 = vmatpush.msra.mxu0 0.0
      %465 = vmatpush.msra.mxu0 0.0
      %466 = vmatpush.msra.mxu0 0.0
      %467 = vmatpush.msra.mxu0 0.0
      %468 = vmatpush.msra.mxu0 0.0
      %469 = vmatpush.msra.mxu0 0.0
      %470 = vmatpush.msra.mxu0 0.0
      %471 = vmatpush.msra.mxu0 0.0
      %472 = vmatpush.msra.mxu0 0.0
      %473 = vmatpush.msra.mxu0 0.0
      %474 = vmatpush.msra.mxu0 0.0
      %475 = vmatpush.msra.mxu0 0.0
      %476 = vmatpush.msra.mxu0 %v411
      %477 = vmatmul.f32.gmra.mxu0 %v414
      %v478 = vpop.f32.mrf.mxu0
      %v479 = vadd.f32 0.0, %v478
      %480 = vmatmul.f32.gmra.mxu0 %v417
      %v481 = vpop.f32.mrf.mxu0
      %v482 = vadd.f32 0.0, %v481
      %483 = vmatmul.f32.gmra.mxu0 %v420
      %v484 = vpop.f32.mrf.mxu0
      %v485 = vadd.f32 0.0, %v484
      %486 = vmatmul.f32.gmra.mxu0 %v423
      %v487 = vpop.f32.mrf.mxu0
      %v488 = vadd.f32 0.0, %v487
      %489 = vmatmul.f32.gmra.mxu0 %v426
      %v490 = vpop.f32.mrf.mxu0
      %v491 = vadd.f32 0.0, %v490
      %492 = vmatmul.f32.gmra.mxu0 %v429
      %v493 = vpop.f32.mrf.mxu0
      %v494 = vadd.f32 0.0, %v493
      %495 = vmatmul.f32.gmra.mxu0 %v432
      %v496 = vpop.f32.mrf.mxu0
      %v497 = vadd.f32 0.0, %v496
      %498 = vmatmul.f32.gmra.mxu0 %v435
      %v499 = vpop.f32.mrf.mxu0
      %v500 = vadd.f32 0.0, %v499
      %501 = vmatmul.f32.gmra.mxu0 %v438
      %v502 = vpop.f32.mrf.mxu0
      %v503 = vadd.f32 0.0, %v502
      %504 = vmatmul.f32.gmra.mxu0 %v441
      %v505 = vpop.f32.mrf.mxu0
      %v506 = vadd.f32 0.0, %v505
      %507 = vmatmul.f32.gmra.mxu0 %v444
      %v508 = vpop.f32.mrf.mxu0
      %v509 = vadd.f32 0.0, %v508
      %510 = vmatmul.f32.gmra.mxu0 %v447
      %v511 = vpop.f32.mrf.mxu0
      %v512 = vadd.f32 0.0, %v511
      %513 = vmatmul.f32.gmra.mxu0 %v450
      %v514 = vpop.f32.mrf.mxu0
      %v515 = vadd.f32 0.0, %v514
      %516 = vmatmul.f32.gmra.mxu0 %v453
      %v517 = vpop.f32.mrf.mxu0
      %v518 = vadd.f32 0.0, %v517
      %519 = vmatmul.f32.gmra.mxu0 %v456
      %v520 = vpop.f32.mrf.mxu0
      %v521 = vadd.f32 0.0, %v520
      %522 = vmatmul.f32.gmra.mxu0 %v459
      %v523 = vpop.f32.mrf.mxu0
      %v524 = vadd.f32 0.0, %v523
      %525 = vdwg.mxu0
      %vm526 = vcmask 261120
      %v528 = vsel %vm526, %v277, 0
      %v531 = vsel %vm526, %v278, 0
      %v534 = vsel %vm526, %v279, 0
      %v537 = vsel %vm526, %v280, 0
      %v540 = vsel %vm526, %v281, 0
      %v543 = vsel %vm526, %v282, 0
      %v546 = vsel %vm526, %v283, 0
      %v549 = vsel %vm526, %v284, 0
      %v552 = vsel %vm526, %v285, 0
      %v555 = vsel %vm526, %v286, 0
      %v558 = vsel %vm526, %v287, 0
      %v561 = vsel %vm526, %v288, 0
      %v564 = vsel %vm526, %v289, 0
      %v567 = vsel %vm526, %v290, 0
      %v570 = vsel %vm526, %v291, 0
      %v573 = vsel %vm526, %v292, 0
      %575 = vmatpush.msra.mxu0 0.0
      %576 = vmatpush.msra.mxu0 0.0
      %577 = vmatpush.msra.mxu0 0.0
      %578 = vmatpush.msra.mxu0 0.0
      %579 = vmatpush.msra.mxu0 0.0
      %580 = vmatpush.msra.mxu0 0.0
      %581 = vmatpush.msra.mxu0 0.0
      %582 = vmatpush.msra.mxu0 0.0
      %583 = vmatpush.msra.mxu0 0.0
      %584 = vmatpush.msra.mxu0 0.0
      %585 = vmatpush.msra.mxu0 0.0
      %586 = vmatpush.msra.mxu0 0.0
      %587 = vmatpush.msra.mxu0 %v296
      %588 = vmatpush.msra.mxu0 %v295
      %589 = vmatpush.msra.mxu0 %v294
      %590 = vmatpush.msra.mxu0 %v293
      %591 = vmatmul.f32.gmra.mxu0 %v528
      %v592 = vpop.f32.mrf.mxu0
      %v593 = vadd.f32 %v479, %v592
      %594 = vmatmul.f32.gmra.mxu0 %v531
      %v595 = vpop.f32.mrf.mxu0
      %v596 = vadd.f32 %v482, %v595
      %597 = vmatmul.f32.gmra.mxu0 %v534
      %v598 = vpop.f32.mrf.mxu0
      %v599 = vadd.f32 %v485, %v598
      %600 = vmatmul.f32.gmra.mxu0 %v537
      %v601 = vpop.f32.mrf.mxu0
      %v602 = vadd.f32 %v488, %v601
      %603 = vmatmul.f32.gmra.mxu0 %v540
      %v604 = vpop.f32.mrf.mxu0
      %v605 = vadd.f32 %v491, %v604
      %606 = vmatmul.f32.gmra.mxu0 %v543
      %v607 = vpop.f32.mrf.mxu0
      %v608 = vadd.f32 %v494, %v607
      %609 = vmatmul.f32.gmra.mxu0 %v546
      %v610 = vpop.f32.mrf.mxu0
      %v611 = vadd.f32 %v497, %v610
      %612 = vmatmul.f32.gmra.mxu0 %v549
      %v613 = vpop.f32.mrf.mxu0
      %v614 = vadd.f32 %v500, %v613
      %615 = vmatmul.f32.gmra.mxu0 %v552
      %v616 = vpop.f32.mrf.mxu0
      %v617 = vadd.f32 %v503, %v616
      %618 = vmatmul.f32.gmra.mxu0 %v555
      %v619 = vpop.f32.mrf.mxu0
      %v620 = vadd.f32 %v506, %v619
      %621 = vmatmul.f32.gmra.mxu0 %v558
      %v622 = vpop.f32.mrf.mxu0
      %v623 = vadd.f32 %v509, %v622
      %624 = vmatmul.f32.gmra.mxu0 %v561
      %v625 = vpop.f32.mrf.mxu0
      %v626 = vadd.f32 %v512, %v625
      %627 = vmatmul.f32.gmra.mxu0 %v564
      %v628 = vpop.f32.mrf.mxu0
      %v629 = vadd.f32 %v515, %v628
      %630 = vmatmul.f32.gmra.mxu0 %v567
      %v631 = vpop.f32.mrf.mxu0
      %v632 = vadd.f32 %v518, %v631
      %633 = vmatmul.f32.gmra.mxu0 %v570
      %v634 = vpop.f32.mrf.mxu0
      %v635 = vadd.f32 %v521, %v634
      %636 = vmatmul.f32.gmra.mxu0 %v573
      %v637 = vpop.f32.mrf.mxu0
      %v638 = vadd.f32 %v524, %v637
      %639 = vdwg.mxu0
      %vm640 = vcmask 523264
      %v641 = vsel %vm640, %v593, 0.0
      %642 = vadd.xlane.f32.xlu0 %v641
      %v643 = vpop.xlane.xlu0 %642
      %v644 = vsel %vm640, %v596, 0.0
      %645 = vadd.xlane.f32.xlu0 %v644
      %v646 = vpop.xlane.xlu0 %645
      %v647 = vsel %vm640, %v599, 0.0
      %648 = vadd.xlane.f32.xlu0 %v647
      %v649 = vpop.xlane.xlu0 %648
      %v650 = vsel %vm640, %v602, 0.0
      %651 = vadd.xlane.f32.xlu0 %v650
      %v652 = vpop.xlane.xlu0 %651
      %v653 = vsel %vm640, %v605, 0.0
      %654 = vadd.xlane.f32.xlu0 %v653
      %v655 = vpop.xlane.xlu0 %654
      %v656 = vsel %vm640, %v608, 0.0
      %657 = vadd.xlane.f32.xlu0 %v656
      %v658 = vpop.xlane.xlu0 %657
      %v659 = vsel %vm640, %v611, 0.0
      %660 = vadd.xlane.f32.xlu0 %v659
      %v661 = vpop.xlane.xlu0 %660
      %v662 = vsel %vm640, %v614, 0.0
      %663 = vadd.xlane.f32.xlu0 %v662
      %v664 = vpop.xlane.xlu0 %663
      %v665 = vsel %vm640, %v617, 0.0
      %666 = vadd.xlane.f32.xlu0 %v665
      %v667 = vpop.xlane.xlu0 %666
      %v668 = vsel %vm640, %v620, 0.0
      %669 = vadd.xlane.f32.xlu0 %v668
      %v670 = vpop.xlane.xlu0 %669
      %v671 = vsel %vm640, %v623, 0.0
      %672 = vadd.xlane.f32.xlu0 %v671
      %v673 = vpop.xlane.xlu0 %672
      %v674 = vsel %vm640, %v626, 0.0
      %675 = vadd.xlane.f32.xlu0 %v674
      %v676 = vpop.xlane.xlu0 %675
      %v677 = vsel %vm640, %v629, 0.0
      %678 = vadd.xlane.f32.xlu0 %v677
      %v679 = vpop.xlane.xlu0 %678
      %v680 = vsel %vm640, %v632, 0.0
      %681 = vadd.xlane.f32.xlu0 %v680
      %v682 = vpop.xlane.xlu0 %681
      %v683 = vsel %vm640, %v635, 0.0
      %684 = vadd.xlane.f32.xlu0 %v683
      %v685 = vpop.xlane.xlu0 %684
      %v686 = vsel %vm640, %v638, 0.0
      %687 = vadd.xlane.f32.xlu0 %v686
      %v688 = vpop.xlane.xlu0 %687
      %v689 = vrcp.pop 64.0
      %v690 = vmul.f32 64.0, %v689
      %v691 = vsub.f32 1.0, %v690
      %v692 = vmul.f32 %v689, %v691
      %v693 = vadd.f32 %v689, %v692
      %vm694 = vweird.f32 %v689
      %v695 = vsel %vm694, %v689, %v693
      %v696 = vmul.f32 %v643, %v695
      %v697 = vmul.f32 %v646, %v695
      %v698 = vmul.f32 %v649, %v695
      %v699 = vmul.f32 %v652, %v695
      %v700 = vmul.f32 %v655, %v695
      %v701 = vmul.f32 %v658, %v695
      %v702 = vmul.f32 %v661, %v695
      %v703 = vmul.f32 %v664, %v695
      %v704 = vmul.f32 %v667, %v695
      %v705 = vmul.f32 %v670, %v695
      %v706 = vmul.f32 %v673, %v695
      %v707 = vmul.f32 %v676, %v695
      %v708 = vmul.f32 %v679, %v695
      %v709 = vmul.f32 %v682, %v695
      %v710 = vmul.f32 %v685, %v695
      %v711 = vmul.f32 %v688, %v695
      %v712 = vsub.f32 %v593, %v696
      %v713 = vsub.f32 %v596, %v697
      %v714 = vsub.f32 %v599, %v698
      %v715 = vsub.f32 %v602, %v699
      %v716 = vsub.f32 %v605, %v700
      %v717 = vsub.f32 %v608, %v701
      %v718 = vsub.f32 %v611, %v702
      %v719 = vsub.f32 %v614, %v703
      %v720 = vsub.f32 %v617, %v704
      %v721 = vsub.f32 %v620, %v705
      %v722 = vsub.f32 %v623, %v706
      %v723 = vsub.f32 %v626, %v707
      %v724 = vsub.f32 %v629, %v708
      %v725 = vsub.f32 %v632, %v709
      %v726 = vsub.f32 %v635, %v710
      %v727 = vsub.f32 %v638, %v711
      %v728 = vmul.f32 %v712, %v712
      %v729 = vmul.f32 %v713, %v713
      %v730 = vmul.f32 %v714, %v714
      %v731 = vmul.f32 %v715, %v715
      %v732 = vmul.f32 %v716, %v716
      %v733 = vmul.f32 %v717, %v717
      %v734 = vmul.f32 %v718, %v718
      %v735 = vmul.f32 %v719, %v719
      %v736 = vmul.f32 %v720, %v720
      %v737 = vmul.f32 %v721, %v721
      %v738 = vmul.f32 %v722, %v722
      %v739 = vmul.f32 %v723, %v723
      %v740 = vmul.f32 %v724, %v724
      %v741 = vmul.f32 %v725, %v725
      %v742 = vmul.f32 %v726, %v726
      %v743 = vmul.f32 %v727, %v727
      %v744 = vsel %vm640, %v728, 0.0
      %745 = vadd.xlane.f32.xlu0 %v744
      %v746 = vpop.xlane.xlu0 %745
      %v747 = vsel %vm640, %v729, 0.0
      %748 = vadd.xlane.f32.xlu0 %v747
      %v749 = vpop.xlane.xlu0 %748
      %v750 = vsel %vm640, %v730, 0.0
      %751 = vadd.xlane.f32.xlu0 %v750
      %v752 = vpop.xlane.xlu0 %751
      %v753 = vsel %vm640, %v731, 0.0
      %754 = vadd.xlane.f32.xlu0 %v753
      %v755 = vpop.xlane.xlu0 %754
      %v756 = vsel %vm640, %v732, 0.0
      %757 = vadd.xlane.f32.xlu0 %v756
      %v758 = vpop.xlane.xlu0 %757
      %v759 = vsel %vm640, %v733, 0.0
      %760 = vadd.xlane.f32.xlu0 %v759
      %v761 = vpop.xlane.xlu0 %760
      %v762 = vsel %vm640, %v734, 0.0
      %763 = vadd.xlane.f32.xlu0 %v762
      %v764 = vpop.xlane.xlu0 %763
      %v765 = vsel %vm640, %v735, 0.0
      %766 = vadd.xlane.f32.xlu0 %v765
      %v767 = vpop.xlane.xlu0 %766
      %v768 = vsel %vm640, %v736, 0.0
      %769 = vadd.xlane.f32.xlu0 %v768
      %v770 = vpop.xlane.xlu0 %769
      %v771 = vsel %vm640, %v737, 0.0
      %772 = vadd.xlane.f32.xlu0 %v771
      %v773 = vpop.xlane.xlu0 %772
      %v774 = vsel %vm640, %v738, 0.0
      %775 = vadd.xlane.f32.xlu0 %v774
      %v776 = vpop.xlane.xlu0 %775
      %v777 = vsel %vm640, %v739, 0.0
      %778 = vadd.xlane.f32.xlu0 %v777
      %v779 = vpop.xlane.xlu0 %778
      %v780 = vsel %vm640, %v740, 0.0
      %781 = vadd.xlane.f32.xlu0 %v780
      %v782 = vpop.xlane.xlu0 %781
      %v783 = vsel %vm640, %v741, 0.0
      %784 = vadd.xlane.f32.xlu0 %v783
      %v785 = vpop.xlane.xlu0 %784
      %v786 = vsel %vm640, %v742, 0.0
      %787 = vadd.xlane.f32.xlu0 %v786
      %v788 = vpop.xlane.xlu0 %787
      %v789 = vsel %vm640, %v743, 0.0
      %790 = vadd.xlane.f32.xlu0 %v789
      %v791 = vpop.xlane.xlu0 %790
      %v792 = vmul.f32 %v746, %v695
      %v793 = vmul.f32 %v749, %v695
      %v794 = vmul.f32 %v752, %v695
      %v795 = vmul.f32 %v755, %v695
      %v796 = vmul.f32 %v758, %v695
      %v797 = vmul.f32 %v761, %v695
      %v798 = vmul.f32 %v764, %v695
      %v799 = vmul.f32 %v767, %v695
      %v800 = vmul.f32 %v770, %v695
      %v801 = vmul.f32 %v773, %v695
      %v802 = vmul.f32 %v776, %v695
      %v803 = vmul.f32 %v779, %v695
      %v804 = vmul.f32 %v782, %v695
      %v805 = vmul.f32 %v785, %v695
      %v806 = vmul.f32 %v788, %v695
      %v807 = vmul.f32 %v791, %v695
      %v808 = vadd.f32 %v792, 1e-05
      %v809 = vadd.f32 %v793, 1e-05
      %v810 = vadd.f32 %v794, 1e-05
      %v811 = vadd.f32 %v795, 1e-05
      %v812 = vadd.f32 %v796, 1e-05
      %v813 = vadd.f32 %v797, 1e-05
      %v814 = vadd.f32 %v798, 1e-05
      %v815 = vadd.f32 %v799, 1e-05
      %v816 = vadd.f32 %v800, 1e-05
      %v817 = vadd.f32 %v801, 1e-05
      %v818 = vadd.f32 %v802, 1e-05
      %v819 = vadd.f32 %v803, 1e-05
      %v820 = vadd.f32 %v804, 1e-05
      %v821 = vadd.f32 %v805, 1e-05
      %v822 = vadd.f32 %v806, 1e-05
      %v823 = vadd.f32 %v807, 1e-05
      %v824 = vrsqrt.pop %v808
      %v825 = vmul.f32 %v824, %v808
      %v826 = vmul.f32 %v825, %v824
      %v827 = vmul.f32 0.5, %v826
      %v828 = vsub.f32 1.5, %v827
      %v829 = vmul.f32 %v824, %v828
      %vm830 = vweird.f32 %v808
      %vm831 = vweird.f32 %v824
      %vm832 = vmor %vm830, %vm831
      %v833 = vsel %vm832, %v824, %v829
      %v834 = vrsqrt.pop %v809
      %v835 = vmul.f32 %v834, %v809
      %v836 = vmul.f32 %v835, %v834
      %v837 = vmul.f32 0.5, %v836
      %v838 = vsub.f32 1.5, %v837
      %v839 = vmul.f32 %v834, %v838
      %vm840 = vweird.f32 %v809
      %vm841 = vweird.f32 %v834
      %vm842 = vmor %vm840, %vm841
      %v843 = vsel %vm842, %v834, %v839
      %v844 = vrsqrt.pop %v810
      %v845 = vmul.f32 %v844, %v810
      %v846 = vmul.f32 %v845, %v844
      %v847 = vmul.f32 0.5, %v846
      %v848 = vsub.f32 1.5, %v847
      %v849 = vmul.f32 %v844, %v848
      %vm850 = vweird.f32 %v810
      %vm851 = vweird.f32 %v844
      %vm852 = vmor %vm850, %vm851
      %v853 = vsel %vm852, %v844, %v849
      %v854 = vrsqrt.pop %v811
      %v855 = vmul.f32 %v854, %v811
      %v856 = vmul.f32 %v855, %v854
      %v857 = vmul.f32 0.5, %v856
      %v858 = vsub.f32 1.5, %v857
      %v859 = vmul.f32 %v854, %v858
      %vm860 = vweird.f32 %v811
      %vm861 = vweird.f32 %v854
      %vm862 = vmor %vm860, %vm861
      %v863 = vsel %vm862, %v854, %v859
      %v864 = vrsqrt.pop %v812
      %v865 = vmul.f32 %v864, %v812
      %v866 = vmul.f32 %v865, %v864
      %v867 = vmul.f32 0.5, %v866
      %v868 = vsub.f32 1.5, %v867
      %v869 = vmul.f32 %v864, %v868
      %vm870 = vweird.f32 %v812
      %vm871 = vweird.f32 %v864
      %vm872 = vmor %vm870, %vm871
      %v873 = vsel %vm872, %v864, %v869
      %v874 = vrsqrt.pop %v813
      %v875 = vmul.f32 %v874, %v813
      %v876 = vmul.f32 %v875, %v874
      %v877 = vmul.f32 0.5, %v876
      %v878 = vsub.f32 1.5, %v877
      %v879 = vmul.f32 %v874, %v878
      %vm880 = vweird.f32 %v813
      %vm881 = vweird.f32 %v874
      %vm882 = vmor %vm880, %vm881
      %v883 = vsel %vm882, %v874, %v879
      %v884 = vrsqrt.pop %v814
      %v885 = vmul.f32 %v884, %v814
      %v886 = vmul.f32 %v885, %v884
      %v887 = vmul.f32 0.5, %v886
      %v888 = vsub.f32 1.5, %v887
      %v889 = vmul.f32 %v884, %v888
      %vm890 = vweird.f32 %v814
      %vm891 = vweird.f32 %v884
      %vm892 = vmor %vm890, %vm891
      %v893 = vsel %vm892, %v884, %v889
      %v894 = vrsqrt.pop %v815
      %v895 = vmul.f32 %v894, %v815
      %v896 = vmul.f32 %v895, %v894
      %v897 = vmul.f32 0.5, %v896
      %v898 = vsub.f32 1.5, %v897
      %v899 = vmul.f32 %v894, %v898
      %vm900 = vweird.f32 %v815
      %vm901 = vweird.f32 %v894
      %vm902 = vmor %vm900, %vm901
      %v903 = vsel %vm902, %v894, %v899
      %v904 = vrsqrt.pop %v816
      %v905 = vmul.f32 %v904, %v816
      %v906 = vmul.f32 %v905, %v904
      %v907 = vmul.f32 0.5, %v906
      %v908 = vsub.f32 1.5, %v907
      %v909 = vmul.f32 %v904, %v908
      %vm910 = vweird.f32 %v816
      %vm911 = vweird.f32 %v904
      %vm912 = vmor %vm910, %vm911
      %v913 = vsel %vm912, %v904, %v909
      %v914 = vrsqrt.pop %v817
      %v915 = vmul.f32 %v914, %v817
      %v916 = vmul.f32 %v915, %v914
      %v917 = vmul.f32 0.5, %v916
      %v918 = vsub.f32 1.5, %v917
      %v919 = vmul.f32 %v914, %v918
      %vm920 = vweird.f32 %v817
      %vm921 = vweird.f32 %v914
      %vm922 = vmor %vm920, %vm921
      %v923 = vsel %vm922, %v914, %v919
      %v924 = vrsqrt.pop %v818
      %v925 = vmul.f32 %v924, %v818
      %v926 = vmul.f32 %v925, %v924
      %v927 = vmul.f32 0.5, %v926
      %v928 = vsub.f32 1.5, %v927
      %v929 = vmul.f32 %v924, %v928
      %vm930 = vweird.f32 %v818
      %vm931 = vweird.f32 %v924
      %vm932 = vmor %vm930, %vm931
      %v933 = vsel %vm932, %v924, %v929
      %v934 = vrsqrt.pop %v819
      %v935 = vmul.f32 %v934, %v819
      %v936 = vmul.f32 %v935, %v934
      %v937 = vmul.f32 0.5, %v936
      %v938 = vsub.f32 1.5, %v937
      %v939 = vmul.f32 %v934, %v938
      %vm940 = vweird.f32 %v819
      %vm941 = vweird.f32 %v934
      %vm942 = vmor %vm940, %vm941
      %v943 = vsel %vm942, %v934, %v939
      %v944 = vrsqrt.pop %v820
      %v945 = vmul.f32 %v944, %v820
      %v946 = vmul.f32 %v945, %v944
      %v947 = vmul.f32 0.5, %v946
      %v948 = vsub.f32 1.5, %v947
      %v949 = vmul.f32 %v944, %v948
      %vm950 = vweird.f32 %v820
      %vm951 = vweird.f32 %v944
      %vm952 = vmor %vm950, %vm951
      %v953 = vsel %vm952, %v944, %v949
      %v954 = vrsqrt.pop %v821
      %v955 = vmul.f32 %v954, %v821
      %v956 = vmul.f32 %v955, %v954
      %v957 = vmul.f32 0.5, %v956
      %v958 = vsub.f32 1.5, %v957
      %v959 = vmul.f32 %v954, %v958
      %vm960 = vweird.f32 %v821
      %vm961 = vweird.f32 %v954
      %vm962 = vmor %vm960, %vm961
      %v963 = vsel %vm962, %v954, %v959
      %v964 = vrsqrt.pop %v822
      %v965 = vmul.f32 %v964, %v822
      %v966 = vmul.f32 %v965, %v964
      %v967 = vmul.f32 0.5, %v966
      %v968 = vsub.f32 1.5, %v967
      %v969 = vmul.f32 %v964, %v968
      %vm970 = vweird.f32 %v822
      %vm971 = vweird.f32 %v964
      %vm972 = vmor %vm970, %vm971
      %v973 = vsel %vm972, %v964, %v969
      %v974 = vrsqrt.pop %v823
      %v975 = vmul.f32 %v974, %v823
      %v976 = vmul.f32 %v975, %v974
      %v977 = vmul.f32 0.5, %v976
      %v978 = vsub.f32 1.5, %v977
      %v979 = vmul.f32 %v974, %v978
      %vm980 = vweird.f32 %v823
      %vm981 = vweird.f32 %v974
      %vm982 = vmor %vm980, %vm981
      %v983 = vsel %vm982, %v974, %v979
      %v984 = vmul.f32 %v712, %v833
      %v985 = vmul.f32 %v713, %v843
      %v986 = vmul.f32 %v714, %v853
      %v987 = vmul.f32 %v715, %v863
      %v988 = vmul.f32 %v716, %v873
      %v989 = vmul.f32 %v717, %v883
      %v990 = vmul.f32 %v718, %v893
      %v991 = vmul.f32 %v719, %v903
      %v992 = vmul.f32 %v720, %v913
      %v993 = vmul.f32 %v721, %v923
      %v994 = vmul.f32 %v722, %v933
      %v995 = vmul.f32 %v723, %v943
      %v996 = vmul.f32 %v724, %v953
      %v997 = vmul.f32 %v725, %v963
      %v998 = vmul.f32 %v726, %v973
      %v999 = vmul.f32 %v727, %v983
      %v1000 = vmax.f32 %v984, 0.0
      %v1001 = vmax.f32 %v985, 0.0
      %v1002 = vmax.f32 %v986, 0.0
      %v1003 = vmax.f32 %v987, 0.0
      %v1004 = vmax.f32 %v988, 0.0
      %v1005 = vmax.f32 %v989, 0.0
      %v1006 = vmax.f32 %v990, 0.0
      %v1007 = vmax.f32 %v991, 0.0
      %v1008 = vmax.f32 %v992, 0.0
      %v1009 = vmax.f32 %v993, 0.0
      %v1010 = vmax.f32 %v994, 0.0
      %v1011 = vmax.f32 %v995, 0.0
      %v1012 = vmax.f32 %v996, 0.0
      %v1013 = vmax.f32 %v997, 0.0
      %v1014 = vmax.f32 %v998, 0.0
      %v1015 = vmax.f32 %v999, 0.0
      %v1016 = vld [vmem:[%s4] sm:$0xff]
      %v1017 = vld [vmem:[%s4 + $0x8] sm:$0xff]
      %v1018 = vld [vmem:[%s4 + $0x10] sm:$0xff]
      %v1019 = vld [vmem:[%s4 + $0x18] sm:$0xff]
      %v1020 = vld [vmem:[%s4 + $0x20] sm:$0xff]
      %v1021 = vld [vmem:[%s4 + $0x28] sm:$0xff]
      %v1022 = vld [vmem:[%s4 + $0x30] sm:$0xff]
      %v1023 = vld [vmem:[%s4 + $0x38] sm:$0xff]
      %v1024 = vld [vmem:[%s5] sm:$0x1]
      %v1026 = vperm.slane %v1024, 0
      %v1029 = vsel %vm640, %v1000, 0
      %v1032 = vsel %vm640, %v1001, 0
      %v1035 = vsel %vm640, %v1002, 0
      %v1038 = vsel %vm640, %v1003, 0
      %v1041 = vsel %vm640, %v1004, 0
      %v1044 = vsel %vm640, %v1005, 0
      %v1047 = vsel %vm640, %v1006, 0
      %v1050 = vsel %vm640, %v1007, 0
      %v1053 = vsel %vm640, %v1008, 0
      %v1056 = vsel %vm640, %v1009, 0
      %v1059 = vsel %vm640, %v1010, 0
      %v1062 = vsel %vm640, %v1011, 0
      %v1065 = vsel %vm640, %v1012, 0
      %v1068 = vsel %vm640, %v1013, 0
      %v1071 = vsel %vm640, %v1014, 0
      %v1074 = vsel %vm640, %v1015, 0
      %1076 = vmatpush.msra.mxu0 0.0
      %1077 = vmatpush.msra.mxu0 0.0
      %1078 = vmatpush.msra.mxu0 0.0
      %1079 = vmatpush.msra.mxu0 0.0
      %1080 = vmatpush.msra.mxu0 0.0
      %1081 = vmatpush.msra.mxu0 0.0
      %1082 = vmatpush.msra.mxu0 0.0
      %1083 = vmatpush.msra.mxu0 0.0
      %1084 = vmatpush.msra.mxu0 %v1023
      %1085 = vmatpush.msra.mxu0 %v1022
      %1086 = vmatpush.msra.mxu0 %v1021
      %1087 = vmatpush.msra.mxu0 %v1020
      %1088 = vmatpush.msra.mxu0 %v1019
      %1089 = vmatpush.msra.mxu0 %v1018
      %1090 = vmatpush.msra.mxu0 %v1017
      %1091 = vmatpush.msra.mxu0 %v1016
      %1092 = vmatmul.f32.gmra.mxu0 %v1029
      %v1093 = vpop.f32.mrf.mxu0
      %v1094 = vadd.f32 %v1026, %v1093
      %1095 = vmatmul.f32.gmra.mxu0 %v1032
      %v1096 = vpop.f32.mrf.mxu0
      %v1097 = vadd.f32 %v1026, %v1096
      %1098 = vmatmul.f32.gmra.mxu0 %v1035
      %v1099 = vpop.f32.mrf.mxu0
      %v1100 = vadd.f32 %v1026, %v1099
      %1101 = vmatmul.f32.gmra.mxu0 %v1038
      %v1102 = vpop.f32.mrf.mxu0
      %v1103 = vadd.f32 %v1026, %v1102
      %1104 = vmatmul.f32.gmra.mxu0 %v1041
      %v1105 = vpop.f32.mrf.mxu0
      %v1106 = vadd.f32 %v1026, %v1105
      %1107 = vmatmul.f32.gmra.mxu0 %v1044
      %v1108 = vpop.f32.mrf.mxu0
      %v1109 = vadd.f32 %v1026, %v1108
      %1110 = vmatmul.f32.gmra.mxu0 %v1047
      %v1111 = vpop.f32.mrf.mxu0
      %v1112 = vadd.f32 %v1026, %v1111
      %1113 = vmatmul.f32.gmra.mxu0 %v1050
      %v1114 = vpop.f32.mrf.mxu0
      %v1115 = vadd.f32 %v1026, %v1114
      %1116 = vmatmul.f32.gmra.mxu0 %v1053
      %v1117 = vpop.f32.mrf.mxu0
      %v1118 = vadd.f32 %v1026, %v1117
      %1119 = vmatmul.f32.gmra.mxu0 %v1056
      %v1120 = vpop.f32.mrf.mxu0
      %v1121 = vadd.f32 %v1026, %v1120
      %1122 = vmatmul.f32.gmra.mxu0 %v1059
      %v1123 = vpop.f32.mrf.mxu0
      %v1124 = vadd.f32 %v1026, %v1123
      %1125 = vmatmul.f32.gmra.mxu0 %v1062
      %v1126 = vpop.f32.mrf.mxu0
      %v1127 = vadd.f32 %v1026, %v1126
      %1128 = vmatmul.f32.gmra.mxu0 %v1065
      %v1129 = vpop.f32.mrf.mxu0
      %v1130 = vadd.f32 %v1026, %v1129
      %1131 = vmatmul.f32.gmra.mxu0 %v1068
      %v1132 = vpop.f32.mrf.mxu0
      %v1133 = vadd.f32 %v1026, %v1132
      %1134 = vmatmul.f32.gmra.mxu0 %v1071
      %v1135 = vpop.f32.mrf.mxu0
      %v1136 = vadd.f32 %v1026, %v1135
      %1137 = vmatmul.f32.gmra.mxu0 %v1074
      %v1138 = vpop.f32.mrf.mxu0
      %v1139 = vadd.f32 %v1026, %v1138
      %1140 = vdwg.mxu0
      %1141 = vst [vmem:[%s275] sm:$0xff] %v1094
      %1142 = vst [vmem:[%s275 + $0x8] sm:$0xff] %v1097
      %1143 = vst [vmem:[%s275 + $0x10] sm:$0xff] %v1100
      %1144 = vst [vmem:[%s275 + $0x18] sm:$0xff] %v1103
      %1145 = vst [vmem:[%s275 + $0x20] sm:$0xff] %v1106
      %1146 = vst [vmem:[%s275 + $0x28] sm:$0xff] %v1109
      %1147 = vst [vmem:[%s275 + $0x30] sm:$0xff] %v1112
      %1148 = vst [vmem:[%s275 + $0x38] sm:$0xff] %v1115
      %1149 = vst [vmem:[%s275 + $0x40] sm:$0xff] %v1118
      %1150 = vst [vmem:[%s275 + $0x48] sm:$0xff] %v1121
      %1151 = vst [vmem:[%s275 + $0x50] sm:$0xff] %v1124
      %1152 = vst [vmem:[%s275 + $0x58] sm:$0xff] %v1127
      %1153 = vst [vmem:[%s275 + $0x60] sm:$0xff] %v1130
      %1154 = vst [vmem:[%s275 + $0x68] sm:$0xff] %v1133
      %1155 = vst [vmem:[%s275 + $0x70] sm:$0xff] %v1136
      %1156 = vst [vmem:[%s275 + $0x78] sm:$0xff] %v1139
      %s1157 = smul.u32 16, %s17
      %p1158 = scmp.lt.s32.totalorder %s1157, 63
      %s1159 = scalar_select %p1158, %s1157, 63
      %s1160 = smul.addr %s1159, 8
      %s1161 = scalar_lea.vmem %s6, %s1160
      // Predicated region
      $region45: #{ext_encoder_forward.1} parent=43 // pred_check
        %p1162 = pneg %p171
      $region46: #{ext_encoder_forward.1} parent=43 // pred_check_branch
        %1164 = sbr.rel (%p1162) target = $region48
      $region47: #{ext_encoder_forward.1} parent=43 // pred_region
        %s1165 = smul.u32 16, %s17
      $region48: #{ext_encoder_forward.1} parent=43 // pred_fallthru
        _
    $region44: #{ext_encoder_forward.1} parent=5 // pred_fallthru
      _
    %p1166 = scmp.le.s32.totalorder 2, %s12
    // Predicated region
    $region49: #{ext_encoder_forward.1} parent=5 // pred_check
      %p1167 = pneg %p1166
    $region50: #{ext_encoder_forward.1} parent=5 // pred_check_branch
      %1169 = sbr.rel (%p1167) target = $region52
    $region51: #{ext_encoder_forward.1} parent=5 // pred_region
      %s1170 = ssub.s32 %s12, 2
      // Predicated region
      $region53: #{ext_encoder_forward.1} parent=51 // pred_check
        %p1171 = pneg %p177
      $region54: #{ext_encoder_forward.1} parent=51 // pred_check_branch
        %1173 = sbr.rel (%p1171) target = $region56
      $region55: #{ext_encoder_forward.1} parent=51 // pred_region
        %s1174 = smul.u32 16, %s18
        %p1175 = scmp.lt.s32.totalorder %s1174, 63
        %s1176 = scalar_select %p1175, %s1174, 63
        %s1177 = smul.addr %s1176, 8
        %s1178 = scalar_lea.vmem %s6, %s1177
      $region56: #{ext_encoder_forward.1} parent=51 // pred_fallthru
        _
    $region52: #{ext_encoder_forward.1} parent=5 // pred_fallthru
      _
  $region6: #{ext_encoder_forward.1} parent=0 // loop_footer
    %s16 = sadd.s32 1, %s12
  $region7: #{ext_encoder_forward.1} parent=0 // loop_footer_branch
    %11 = sbr.rel target = $region3
  $region8: #{ext_encoder_forward.1} parent=0 // loop_exit
    _

</llo_original>
